<compile_context>
chip_gen: v7x
topology: tpu7x:2x2x1
jax: 0.10.0
libtpu: 0.0.40
codegen_flags: <defaults>
</compile_context>

<pallas_src>
import math
import functools

import jax
import jax.numpy as jnp
from jax import lax
from jax.experimental import pallas as pl
from jax.experimental.pallas import tpu as pltpu


def gct_layer_kernel(h_ref, mask_ref, w_ref, b_ref, out_ref, probs_ref,
                     *, batch, seq, num_heads, head_dim):
    B, S, H, D = batch, seq, num_heads, head_dim
    E = H * D
    BS = B * S

    h = h_ref[...]                               # (B*S, E)
    mask = mask_ref[...]                         # (B*S, B*S) additive; cross-batch = -1e9

    # ---- fused Q/K/V projection: one MXU matmul over the whole batch slab.
    # (1/sqrt(D) is already folded into the query columns of w/b by the wrapper.)
    qkv = (jnp.dot(h, w_ref[:, :3 * E], preferred_element_type=jnp.float32)
           + b_ref[0:1, :])                      # (B*S, 3E)
    # TODO(synk): at production sizes cast matmul operands to bf16 (f32 accumulation);
    # legal on all generations (v5e MXU is bf16-native; only its VPU/EUP lack bf16) but
    # buys nothing at these latency-bound shapes and would loosen the 1e-4 checks.

    # ---- block-diagonal batched attention: per head, batch all B at once.
    ctx_parts = []
    for hh in range(H):
        qh = qkv[:, hh * D:(hh + 1) * D]                     # (B*S, D)
        kh = qkv[:, E + hh * D:E + (hh + 1) * D]             # (B*S, D)
        vh = qkv[:, 2 * E + hh * D:2 * E + (hh + 1) * D]     # (B*S, D)

        # scores[(b,qi),(b',ki)] = sum_d qh * kh ; only per-batch diagonal blocks are
        # valid, cross-batch entries are pushed to -1e9 by `mask` so they exp to 0.
        s = lax.dot_general(qh, kh, (((1,), (1,)), ((), ())),
                            preferred_element_type=jnp.float32) + mask   # (BS, BS)
        m = jnp.max(s, axis=-1, keepdims=True)
        e = jnp.exp(s - m)
        # approx=False: attention_probs are an output checked at 1e-4; the refinement
        # cost on a few (16,16) tiles is negligible in this latency-bound kernel.
        p = e * pl.reciprocal(jnp.sum(e, axis=-1, keepdims=True), approx=False)

        probs_ref[hh] = p                                    # (BS, BS) per-head slab
        ctx_parts.append(jnp.dot(p, vh,
                                 preferred_element_type=jnp.float32))   # (BS, D)

    ctx = jnp.concatenate(ctx_parts, axis=1)                 # (B*S, E)

    # ---- SelfOutput: relu(dense(ctx)) (+ dropout == identity) + residual, LayerNorm.
    w_o = w_ref[:, 3 * E:4 * E]
    b_o = b_ref[1:2, 0:E]
    gamma = b_ref[1:2, E:2 * E]
    beta = b_ref[1:2, 2 * E:3 * E]

    act = jnp.maximum(
        jnp.dot(ctx, w_o, preferred_element_type=jnp.float32) + b_o, 0.0)
    x = act + h
    # single-pass LayerNorm statistics: var = E[x^2] - mu^2 (fine in f32 here)
    mu = jnp.mean(x, axis=-1, keepdims=True)
    var = jnp.mean(x * x, axis=-1, keepdims=True) - mu * mu
    out_ref[...] = (x - mu) * lax.rsqrt(var + 1e-5) * gamma + beta


def gct_layer_forward(hidden_states, attention_mask, params, *, num_heads):
    B, S, E = hidden_states.shape
    H = num_heads
    assert E % H == 0
    D = E // H
    BS = B * S
    wq, bq, wk, bk, wv, bv, wo, bo, gamma, beta = params

    # ---- one-time parameter packing (layout plumbing, not per-call compute) ----
    scale = 1.0 / math.sqrt(D)
    w_all = jnp.concatenate([wq * scale, wk, wv, wo], axis=1)            # (E, 4E)
    b_all = jnp.stack([jnp.concatenate([bq[0] * scale, bk[0], bv[0]]),
                       jnp.concatenate([bo[0], gamma[0], beta[0]])])     # (2, 3E)

    h2 = hidden_states.reshape(BS, E)

    # combined additive mask over the (B*S, B*S) batched score matrix:
    # per-batch diagonal blocks carry attention_mask, cross-batch blocks are -1e9.
    same_batch = (jnp.arange(B)[:, None, None, None] ==
                  jnp.arange(B)[None, None, :, None])                    # (B,1,B,1)
    mask_full = jnp.where(same_batch, attention_mask[:, :, None, :],
                          jnp.float32(-1e9)).reshape(BS, BS)

    kernel = functools.partial(gct_layer_kernel, batch=B, seq=S,
                               num_heads=H, head_dim=D)

    def full_spec(shape):
        zeros = (0,) * len(shape)
        return pl.BlockSpec(shape, lambda i, _z=zeros: _z)

    # Single grid step: everything is VMEM-resident at these toy shapes.
    # TODO(synk): on v7x split the batch over the 2 TensorCores (leading "parallel"
    # grid axis of size 2); and re-tile with BlockSpec pipelining before scaling to
    # production shapes (the all-resident design will not fit v7x's 64 MiB VMEM).
    grid_spec = pltpu.PrefetchScalarGridSpec(
        num_scalar_prefetch=0,
        grid=(1,),
        in_specs=[
            full_spec((BS, E)),            # hidden_states (flattened)
            full_spec((BS, BS)),           # combined additive mask
            full_spec((E, 4 * E)),         # packed [wq*s | wk | wv | wo]
            full_spec((2, 3 * E)),         # packed [bq*s|bk|bv] / [bo|gamma|beta]
        ],
        out_specs=[
            full_spec((BS, E)),            # attention_output (flattened)
            full_spec((H, BS, BS)),        # batched attention_probs (per head)
        ],
    )

    out_flat, probs_full = pl.pallas_call(
        kernel,
        out_shape=(jax.ShapeDtypeStruct((BS, E), jnp.float32),
                   jax.ShapeDtypeStruct((H, BS, BS), jnp.float32)),
        grid_spec=grid_spec,
        compiler_params=pltpu.CompilerParams(
            dimension_semantics=("arbitrary",),
            vmem_limit_bytes=32 * 1024 * 1024),
    )(h2, mask_full, w_all, b_all)

    # wrapper-side layout plumbing back to the module's output shapes
    out = out_flat.reshape(B, S, E)
    pf = probs_full.reshape(H, B, S, B, S)
    idx = jnp.arange(B)
    probs = pf[:, idx, :, idx, :]          # diagonal batch blocks -> (B, H, S, S)
    return out, probs


def reference_forward(hidden_states, attention_mask, params, *, num_heads):
    """Pure-JAX replica of the PyTorch forward, for verification."""
    wq, bq, wk, bk, wv, bv, wo, bo, gamma, beta = params
    B, S, E = hidden_states.shape
    D = E // num_heads

    def split_heads(x):
        return x.reshape(B, S, num_heads, D).transpose(0, 2, 1, 3)

    q = split_heads(hidden_states @ wq + bq[0])
    k = split_heads(hidden_states @ wk + bk[0])
    v = split_heads(hidden_states @ wv + bv[0])

    scores = jnp.einsum("bhqd,bhkd->bhqk", q, k) / math.sqrt(D)
    scores = scores + attention_mask[:, None, :, :]
    probs = jax.nn.softmax(scores, axis=-1)

    ctx = jnp.einsum("bhqk,bhkd->bhqd", probs, v)
    ctx = ctx.transpose(0, 2, 1, 3).reshape(B, S, E)

    act = jax.nn.relu(ctx @ wo + bo[0])
    x = act + hidden_states
    mu = jnp.mean(x, axis=-1, keepdims=True)
    var = jnp.mean((x - mu) ** 2, axis=-1, keepdims=True)
    y = (x - mu) / jnp.sqrt(var + 1e-5) * gamma[0] + beta[0]
    return y, probs


if __name__ == "__main__":
    B, S, E, H = 2, 8, 32, 4  # batch, seq (graph nodes), embedding, heads

    key = jax.random.PRNGKey(0)
    keys = jax.random.split(key, 12)

    hidden_states = jax.random.normal(keys[0], (B, S, E), dtype=jnp.float32)
    # additive attention mask (0 = keep, large negative = masked)
    mask_bits = jax.random.bernoulli(keys[1], p=0.9, shape=(B, 1, S))
    attention_mask = jnp.where(mask_bits, 0.0, -1e9).astype(jnp.float32)
    attention_mask = jnp.broadcast_to(attention_mask, (B, S, S))

    def lin_init(kw, kb, fan_in, fan_out):
        bound = 1.0 / math.sqrt(fan_in)
        # weight stored as (in, out) == torch weight.T
        w = jax.random.uniform(kw, (fan_in, fan_out), jnp.float32, -bound, bound)
        b = jax.random.uniform(kb, (1, fan_out), jnp.float32, -bound, bound)
        return w, b

    wq, bq = lin_init(keys[2], keys[3], E, E)
    wk, bk = lin_init(keys[4], keys[5], E, E)
    wv, bv = lin_init(keys[6], keys[7], E, E)
    wo, bo = lin_init(keys[8], keys[9], E, E)
    gamma = jnp.ones((1, E), jnp.float32)   # nn.LayerNorm default
    beta = jnp.zeros((1, E), jnp.float32)

    params = (wq, bq, wk, bk, wv, bv, wo, bo, gamma, beta)

    # TODO(synk): dropout is treated as identity (eval mode); the stack_idx==0 / prior
    # branch (probs = prior broadcast over heads) and the unused guide_mask argument
    # are not exercised here.

    out, probs = gct_layer_forward(hidden_states, attention_mask, params, num_heads=H)
    out = jax.block_until_ready(out)
    probs = jax.block_until_ready(probs)

    ref_out, ref_probs = reference_forward(hidden_states, attention_mask, params,
                                           num_heads=H)
    assert jnp.allclose(out, ref_out, atol=1e-4, rtol=1e-4), "output mismatch"
    assert jnp.allclose(probs, ref_probs, atol=1e-4, rtol=1e-4), "probs mismatch"

    print("KERNEL_OK")
</pallas_src>

<mosaic_0001>
module attributes {stable_mosaic.version = 11 : i64} {
  func.func @gct_layer_kernel(%arg0: i32, %arg1: memref<16x32xf32, #tpu.memory_space<vmem>>, %arg2: memref<16x16xf32, #tpu.memory_space<vmem>>, %arg3: memref<32x128xf32, #tpu.memory_space<vmem>>, %arg4: memref<2x96xf32, #tpu.memory_space<vmem>>, %arg5: memref<16x32xf32, #tpu.memory_space<vmem>>, %arg6: memref<4x16x16xf32, #tpu.memory_space<vmem>>) attributes {dimension_semantics = [#tpu.dimension_semantics<arbitrary>], iteration_bounds = array<i64: 1>, scalar_prefetch = 0 : i64, scratch_operands = 0 : i64, tpu.core_type = #tpu.core_type<tc>, window_params = [{pipeline_mode = #tpu.pipeline_mode<synchronous>, transform_indices = @transform_0, window_bounds = array<i64: 16, 32>}, {pipeline_mode = #tpu.pipeline_mode<synchronous>, transform_indices = @transform_1, window_bounds = array<i64: 16, 16>}, {pipeline_mode = #tpu.pipeline_mode<synchronous>, transform_indices = @transform_2, window_bounds = array<i64: 32, 128>}, {pipeline_mode = #tpu.pipeline_mode<synchronous>, transform_indices = @transform_3, window_bounds = array<i64: 2, 96>}, {pipeline_mode = #tpu.pipeline_mode<synchronous>, transform_indices = @transform_4, window_bounds = array<i64: 16, 32>}, {pipeline_mode = #tpu.pipeline_mode<synchronous>, transform_indices = @transform_5, window_bounds = array<i64: 4, 16, 16>}]} {
    %c0 = arith.constant 0 : index
    %c0_0 = arith.constant 0 : index
    %0 = vector.load %arg1[%c0, %c0_0] : memref<16x32xf32, #tpu.memory_space<vmem>>, vector<16x32xf32>
    %c0_1 = arith.constant 0 : index
    %c0_2 = arith.constant 0 : index
    %1 = vector.load %arg2[%c0_1, %c0_2] : memref<16x16xf32, #tpu.memory_space<vmem>>, vector<16x16xf32>
    %c0_3 = arith.constant 0 : index
    %c0_4 = arith.constant 0 : index
    %2 = vector.load %arg3[%c0_3, %c0_4] : memref<32x128xf32, #tpu.memory_space<vmem>>, vector<32x96xf32>
    %cst = arith.constant dense<0.000000e+00> : vector<16x96xf32>
    %3 = tpu.matmul %0, %2, %cst {dimension_numbers = #tpu.dot_dimension_numbers<[1], [0], [0], [1], [0, 0, 1, 1], [], []>} : vector<16x32xf32>, vector<32x96xf32>, vector<16x96xf32> -> vector<16x96xf32>
    %c0_5 = arith.constant 0 : index
    %c0_6 = arith.constant 0 : index
    %4 = vector.load %arg4[%c0_5, %c0_6] : memref<2x96xf32, #tpu.memory_space<vmem>>, vector<1x96xf32>
    %5 = vector.broadcast %4 : vector<1x96xf32> to vector<16x96xf32>
    %6 = arith.addf %3, %5 : vector<16x96xf32>
    %7 = vector.extract_strided_slice %6 {offsets = [0, 0], sizes = [16, 8], strides = [1, 1]} : vector<16x96xf32> to vector<16x8xf32>
    %8 = vector.extract_strided_slice %6 {offsets = [0, 32], sizes = [16, 8], strides = [1, 1]} : vector<16x96xf32> to vector<16x8xf32>
    %9 = vector.extract_strided_slice %6 {offsets = [0, 64], sizes = [16, 8], strides = [1, 1]} : vector<16x96xf32> to vector<16x8xf32>
    %cst_7 = arith.constant dense<0.000000e+00> : vector<16x16xf32>
    %10 = tpu.matmul %7, %8, %cst_7 {dimension_numbers = #tpu.dot_dimension_numbers<[1], [1], [0], [0], [0, 0, 1, 0], [], []>} : vector<16x8xf32>, vector<16x8xf32>, vector<16x16xf32> -> vector<16x16xf32>
    %11 = arith.addf %10, %1 : vector<16x16xf32>
    %cst_8 = arith.constant dense<0xFF800000> : vector<16xf32>
    %12 = vector.multi_reduction <maximumf>, %11, %cst_8 [1] : vector<16x16xf32> to vector<16xf32>
    %13 = vector.shape_cast %12 : vector<16xf32> to vector<16x1xf32>
    %14 = vector.broadcast %13 : vector<16x1xf32> to vector<16x16xf32>
    %15 = arith.subf %11, %14 : vector<16x16xf32>
    %16 = math.exp %15 : vector<16x16xf32>
    %cst_9 = arith.constant dense<0.000000e+00> : vector<16xf32>
    %17 = vector.multi_reduction <add>, %16, %cst_9 [1] : vector<16x16xf32> to vector<16xf32>
    %18 = vector.shape_cast %17 : vector<16xf32> to vector<16x1xf32>
    %19 = tpu.reciprocal %18 : vector<16x1xf32> -> vector<16x1xf32>
    %20 = vector.broadcast %19 : vector<16x1xf32> to vector<16x16xf32>
    %21 = arith.mulf %16, %20 : vector<16x16xf32>
    %c0_10 = arith.constant 0 : index
    %c0_11 = arith.constant 0 : index
    %c0_12 = arith.constant 0 : index
    %22 = vector.load %arg6[%c0_10, %c0_11, %c0_12] : memref<4x16x16xf32, #tpu.memory_space<vmem>>, vector<1x16x16xf32>
    %23 = vector.shape_cast %22 : vector<1x16x16xf32> to vector<16x16xf32>
    %24 = vector.shape_cast %21 : vector<16x16xf32> to vector<1x16x16xf32>
    tpu.vector_store %arg6[%c0_10, %c0_11, %c0_12], %24 {strides = array<i32>} : memref<4x16x16xf32, #tpu.memory_space<vmem>>, vector<1x16x16xf32>,
    %cst_13 = arith.constant dense<0.000000e+00> : vector<16x8xf32>
    %25 = tpu.matmul %21, %9, %cst_13 {dimension_numbers = #tpu.dot_dimension_numbers<[1], [0], [0], [1], [0, 0, 1, 1], [], []>} : vector<16x16xf32>, vector<16x8xf32>, vector<16x8xf32> -> vector<16x8xf32>
    %26 = vector.extract_strided_slice %6 {offsets = [0, 8], sizes = [16, 8], strides = [1, 1]} : vector<16x96xf32> to vector<16x8xf32>
    %27 = vector.extract_strided_slice %6 {offsets = [0, 40], sizes = [16, 8], strides = [1, 1]} : vector<16x96xf32> to vector<16x8xf32>
    %28 = vector.extract_strided_slice %6 {offsets = [0, 72], sizes = [16, 8], strides = [1, 1]} : vector<16x96xf32> to vector<16x8xf32>
    %cst_14 = arith.constant dense<0.000000e+00> : vector<16x16xf32>
    %29 = tpu.matmul %26, %27, %cst_14 {dimension_numbers = #tpu.dot_dimension_numbers<[1], [1], [0], [0], [0, 0, 1, 0], [], []>} : vector<16x8xf32>, vector<16x8xf32>, vector<16x16xf32> -> vector<16x16xf32>
    %30 = arith.addf %29, %1 : vector<16x16xf32>
    %cst_15 = arith.constant dense<0xFF800000> : vector<16xf32>
    %31 = vector.multi_reduction <maximumf>, %30, %cst_15 [1] : vector<16x16xf32> to vector<16xf32>
    %32 = vector.shape_cast %31 : vector<16xf32> to vector<16x1xf32>
    %33 = vector.broadcast %32 : vector<16x1xf32> to vector<16x16xf32>
    %34 = arith.subf %30, %33 : vector<16x16xf32>
    %35 = math.exp %34 : vector<16x16xf32>
    %cst_16 = arith.constant dense<0.000000e+00> : vector<16xf32>
    %36 = vector.multi_reduction <add>, %35, %cst_16 [1] : vector<16x16xf32> to vector<16xf32>
    %37 = vector.shape_cast %36 : vector<16xf32> to vector<16x1xf32>
    %38 = tpu.reciprocal %37 : vector<16x1xf32> -> vector<16x1xf32>
    %39 = vector.broadcast %38 : vector<16x1xf32> to vector<16x16xf32>
    %40 = arith.mulf %35, %39 : vector<16x16xf32>
    %c1 = arith.constant 1 : index
    %c0_17 = arith.constant 0 : index
    %c0_18 = arith.constant 0 : index
    %41 = vector.load %arg6[%c1, %c0_17, %c0_18] : memref<4x16x16xf32, #tpu.memory_space<vmem>>, vector<1x16x16xf32>
    %42 = vector.shape_cast %41 : vector<1x16x16xf32> to vector<16x16xf32>
    %43 = vector.shape_cast %40 : vector<16x16xf32> to vector<1x16x16xf32>
    tpu.vector_store %arg6[%c1, %c0_17, %c0_18], %43 {strides = array<i32>} : memref<4x16x16xf32, #tpu.memory_space<vmem>>, vector<1x16x16xf32>,
    %cst_19 = arith.constant dense<0.000000e+00> : vector<16x8xf32>
    %44 = tpu.matmul %40, %28, %cst_19 {dimension_numbers = #tpu.dot_dimension_numbers<[1], [0], [0], [1], [0, 0, 1, 1], [], []>} : vector<16x16xf32>, vector<16x8xf32>, vector<16x8xf32> -> vector<16x8xf32>
    %45 = vector.extract_strided_slice %6 {offsets = [0, 16], sizes = [16, 8], strides = [1, 1]} : vector<16x96xf32> to vector<16x8xf32>
    %46 = vector.extract_strided_slice %6 {offsets = [0, 48], sizes = [16, 8], strides = [1, 1]} : vector<16x96xf32> to vector<16x8xf32>
    %47 = vector.extract_strided_slice %6 {offsets = [0, 80], sizes = [16, 8], strides = [1, 1]} : vector<16x96xf32> to vector<16x8xf32>
    %cst_20 = arith.constant dense<0.000000e+00> : vector<16x16xf32>
    %48 = tpu.matmul %45, %46, %cst_20 {dimension_numbers = #tpu.dot_dimension_numbers<[1], [1], [0], [0], [0, 0, 1, 0], [], []>} : vector<16x8xf32>, vector<16x8xf32>, vector<16x16xf32> -> vector<16x16xf32>
    %49 = arith.addf %48, %1 : vector<16x16xf32>
    %cst_21 = arith.constant dense<0xFF800000> : vector<16xf32>
    %50 = vector.multi_reduction <maximumf>, %49, %cst_21 [1] : vector<16x16xf32> to vector<16xf32>
    %51 = vector.shape_cast %50 : vector<16xf32> to vector<16x1xf32>
    %52 = vector.broadcast %51 : vector<16x1xf32> to vector<16x16xf32>
    %53 = arith.subf %49, %52 : vector<16x16xf32>
    %54 = math.exp %53 : vector<16x16xf32>
    %cst_22 = arith.constant dense<0.000000e+00> : vector<16xf32>
    %55 = vector.multi_reduction <add>, %54, %cst_22 [1] : vector<16x16xf32> to vector<16xf32>
    %56 = vector.shape_cast %55 : vector<16xf32> to vector<16x1xf32>
    %57 = tpu.reciprocal %56 : vector<16x1xf32> -> vector<16x1xf32>
    %58 = vector.broadcast %57 : vector<16x1xf32> to vector<16x16xf32>
    %59 = arith.mulf %54, %58 : vector<16x16xf32>
    %c2 = arith.constant 2 : index
    %c0_23 = arith.constant 0 : index
    %c0_24 = arith.constant 0 : index
    %60 = vector.load %arg6[%c2, %c0_23, %c0_24] : memref<4x16x16xf32, #tpu.memory_space<vmem>>, vector<1x16x16xf32>
    %61 = vector.shape_cast %60 : vector<1x16x16xf32> to vector<16x16xf32>
    %62 = vector.shape_cast %59 : vector<16x16xf32> to vector<1x16x16xf32>
    tpu.vector_store %arg6[%c2, %c0_23, %c0_24], %62 {strides = array<i32>} : memref<4x16x16xf32, #tpu.memory_space<vmem>>, vector<1x16x16xf32>,
    %cst_25 = arith.constant dense<0.000000e+00> : vector<16x8xf32>
    %63 = tpu.matmul %59, %47, %cst_25 {dimension_numbers = #tpu.dot_dimension_numbers<[1], [0], [0], [1], [0, 0, 1, 1], [], []>} : vector<16x16xf32>, vector<16x8xf32>, vector<16x8xf32> -> vector<16x8xf32>
    %64 = vector.extract_strided_slice %6 {offsets = [0, 24], sizes = [16, 8], strides = [1, 1]} : vector<16x96xf32> to vector<16x8xf32>
    %65 = vector.extract_strided_slice %6 {offsets = [0, 56], sizes = [16, 8], strides = [1, 1]} : vector<16x96xf32> to vector<16x8xf32>
    %66 = vector.extract_strided_slice %6 {offsets = [0, 88], sizes = [16, 8], strides = [1, 1]} : vector<16x96xf32> to vector<16x8xf32>
    %cst_26 = arith.constant dense<0.000000e+00> : vector<16x16xf32>
    %67 = tpu.matmul %64, %65, %cst_26 {dimension_numbers = #tpu.dot_dimension_numbers<[1], [1], [0], [0], [0, 0, 1, 0], [], []>} : vector<16x8xf32>, vector<16x8xf32>, vector<16x16xf32> -> vector<16x16xf32>
    %68 = arith.addf %67, %1 : vector<16x16xf32>
    %cst_27 = arith.constant dense<0xFF800000> : vector<16xf32>
    %69 = vector.multi_reduction <maximumf>, %68, %cst_27 [1] : vector<16x16xf32> to vector<16xf32>
    %70 = vector.shape_cast %69 : vector<16xf32> to vector<16x1xf32>
    %71 = vector.broadcast %70 : vector<16x1xf32> to vector<16x16xf32>
    %72 = arith.subf %68, %71 : vector<16x16xf32>
    %73 = math.exp %72 : vector<16x16xf32>
    %cst_28 = arith.constant dense<0.000000e+00> : vector<16xf32>
    %74 = vector.multi_reduction <add>, %73, %cst_28 [1] : vector<16x16xf32> to vector<16xf32>
    %75 = vector.shape_cast %74 : vector<16xf32> to vector<16x1xf32>
    %76 = tpu.reciprocal %75 : vector<16x1xf32> -> vector<16x1xf32>
    %77 = vector.broadcast %76 : vector<16x1xf32> to vector<16x16xf32>
    %78 = arith.mulf %73, %77 : vector<16x16xf32>
    %c3 = arith.constant 3 : index
    %c0_29 = arith.constant 0 : index
    %c0_30 = arith.constant 0 : index
    %79 = vector.load %arg6[%c3, %c0_29, %c0_30] : memref<4x16x16xf32, #tpu.memory_space<vmem>>, vector<1x16x16xf32>
    %80 = vector.shape_cast %79 : vector<1x16x16xf32> to vector<16x16xf32>
    %81 = vector.shape_cast %78 : vector<16x16xf32> to vector<1x16x16xf32>
    tpu.vector_store %arg6[%c3, %c0_29, %c0_30], %81 {strides = array<i32>} : memref<4x16x16xf32, #tpu.memory_space<vmem>>, vector<1x16x16xf32>,
    %cst_31 = arith.constant dense<0.000000e+00> : vector<16x8xf32>
    %82 = tpu.matmul %78, %66, %cst_31 {dimension_numbers = #tpu.dot_dimension_numbers<[1], [0], [0], [1], [0, 0, 1, 1], [], []>} : vector<16x16xf32>, vector<16x8xf32>, vector<16x8xf32> -> vector<16x8xf32>
    %83 = tpu.concatenate %25, %44, %63, %82 in 1 : vector<16x8xf32>, vector<16x8xf32>, vector<16x8xf32>, vector<16x8xf32> -> vector<16x32xf32>
    %c0_32 = arith.constant 0 : index
    %c96 = arith.constant 96 : index
    %84 = vector.load %arg3[%c0_32, %c96] : memref<32x128xf32, #tpu.memory_space<vmem>>, vector<32x32xf32>
    %c1_33 = arith.constant 1 : index
    %c0_34 = arith.constant 0 : index
    %85 = vector.load %arg4[%c1_33, %c0_34] : memref<2x96xf32, #tpu.memory_space<vmem>>, vector<1x32xf32>
    %c1_35 = arith.constant 1 : index
    %c32 = arith.constant 32 : index
    %86 = vector.load %arg4[%c1_35, %c32] : memref<2x96xf32, #tpu.memory_space<vmem>>, vector<1x32xf32>
    %c1_36 = arith.constant 1 : index
    %c64 = arith.constant 64 : index
    %87 = vector.load %arg4[%c1_36, %c64] : memref<2x96xf32, #tpu.memory_space<vmem>>, vector<1x32xf32>
    %cst_37 = arith.constant dense<0.000000e+00> : vector<16x32xf32>
    %88 = tpu.matmul %83, %84, %cst_37 {dimension_numbers = #tpu.dot_dimension_numbers<[1], [0], [0], [1], [0, 0, 1, 1], [], []>} : vector<16x32xf32>, vector<32x32xf32>, vector<16x32xf32> -> vector<16x32xf32>
    %89 = vector.broadcast %85 : vector<1x32xf32> to vector<16x32xf32>
    %90 = arith.addf %88, %89 : vector<16x32xf32>
    %cst_38 = arith.constant 0.000000e+00 : f32
    %91 = vector.broadcast %cst_38 : f32 to vector<16x32xf32>
    %92 = arith.maximumf %90, %91 : vector<16x32xf32>
    %93 = arith.addf %92, %0 : vector<16x32xf32>
    %cst_39 = arith.constant dense<0.000000e+00> : vector<16xf32>
    %94 = vector.multi_reduction <add>, %93, %cst_39 [1] : vector<16x32xf32> to vector<16xf32>
    %95 = vector.shape_cast %94 : vector<16xf32> to vector<16x1xf32>
    %cst_40 = arith.constant 3.200000e+01 : f32
    %96 = vector.broadcast %cst_40 : f32 to vector<16x1xf32>
    %97 = arith.divf %95, %96 : vector<16x1xf32>
    %98 = arith.mulf %93, %93 : vector<16x32xf32>
    %cst_41 = arith.constant dense<0.000000e+00> : vector<16xf32>
    %99 = vector.multi_reduction <add>, %98, %cst_41 [1] : vector<16x32xf32> to vector<16xf32>
    %100 = vector.shape_cast %99 : vector<16xf32> to vector<16x1xf32>
    %cst_42 = arith.constant 3.200000e+01 : f32
    %101 = vector.broadcast %cst_42 : f32 to vector<16x1xf32>
    %102 = arith.divf %100, %101 : vector<16x1xf32>
    %103 = arith.mulf %97, %97 : vector<16x1xf32>
    %104 = arith.subf %102, %103 : vector<16x1xf32>
    %105 = vector.broadcast %97 : vector<16x1xf32> to vector<16x32xf32>
    %106 = arith.subf %93, %105 : vector<16x32xf32>
    %cst_43 = arith.constant 9.99999974E-6 : f32
    %107 = vector.broadcast %cst_43 : f32 to vector<16x1xf32>
    %108 = arith.addf %104, %107 : vector<16x1xf32>
    %109 = math.rsqrt %108 : vector<16x1xf32>
    %110 = vector.broadcast %109 : vector<16x1xf32> to vector<16x32xf32>
    %111 = arith.mulf %106, %110 : vector<16x32xf32>
    %112 = vector.broadcast %86 : vector<1x32xf32> to vector<16x32xf32>
    %113 = arith.mulf %111, %112 : vector<16x32xf32>
    %114 = vector.broadcast %87 : vector<1x32xf32> to vector<16x32xf32>
    %115 = arith.addf %113, %114 : vector<16x32xf32>
    %c0_44 = arith.constant 0 : index
    %c0_45 = arith.constant 0 : index
    %116 = vector.load %arg5[%c0_44, %c0_45] : memref<16x32xf32, #tpu.memory_space<vmem>>, vector<16x32xf32>
    tpu.vector_store %arg5[%c0_44, %c0_45], %115 {strides = array<i32>} : memref<16x32xf32, #tpu.memory_space<vmem>>, vector<16x32xf32>,
    return
  }
  func.func @transform_0(%arg0: i32) -> (i32, i32) {
    %c0_i32 = arith.constant 0 : i32
    %c0_i32_0 = arith.constant 0 : i32
    %c0_i32_1 = arith.constant 0 : i32
    return %c0_i32, %c0_i32_0 : i32, i32
  }
  func.func @transform_1(%arg0: i32) -> (i32, i32) {
    %c0_i32 = arith.constant 0 : i32
    %c0_i32_0 = arith.constant 0 : i32
    %c0_i32_1 = arith.constant 0 : i32
    return %c0_i32, %c0_i32_0 : i32, i32
  }
  func.func @transform_2(%arg0: i32) -> (i32, i32) {
    %c0_i32 = arith.constant 0 : i32
    %c0_i32_0 = arith.constant 0 : i32
    %c0_i32_1 = arith.constant 0 : i32
    return %c0_i32, %c0_i32_0 : i32, i32
  }
  func.func @transform_3(%arg0: i32) -> (i32, i32) {
    %c0_i32 = arith.constant 0 : i32
    %c0_i32_0 = arith.constant 0 : i32
    %c0_i32_1 = arith.constant 0 : i32
    return %c0_i32, %c0_i32_0 : i32, i32
  }
  func.func @transform_4(%arg0: i32) -> (i32, i32) {
    %c0_i32 = arith.constant 0 : i32
    %c0_i32_0 = arith.constant 0 : i32
    %c0_i32_1 = arith.constant 0 : i32
    return %c0_i32, %c0_i32_0 : i32, i32
  }
  func.func @transform_5(%arg0: i32) -> (i32, i32, i32) {
    %c0_i32 = arith.constant 0 : i32
    %c0_i32_0 = arith.constant 0 : i32
    %c0_i32_1 = arith.constant 0 : i32
    %c0_i32_2 = arith.constant 0 : i32
    return %c0_i32, %c0_i32_0, %c0_i32_1 : i32, i32, i32
  }
}

</mosaic_0001>

<llo_original>
// kernel: tpu_custom_call.1
$region0: #{tpu_custom_call.1}
  #allocation0 [shape = 'u32[]', space=smem, size = 0x4, offset = 0x4, fixed_abs, tag = 'smem constant byte address 0x4 - core index']
  #allocation1 [shape = 'u32[144,128]{1,0:T(1,128)}', space=vmem, size = 0x12000, scoped, tag = 'internal scratch']
  %s0 = inlined_call_operand.hbm [shape: f32[16,32], index: 0, kind: input, shape index: {}]
  %s1 = inlined_call_operand.hbm [shape: f32[16,16], index: 1, kind: input, shape index: {}]
  %s2 = inlined_call_operand.hbm [shape: f32[32,128], index: 2, kind: input, shape index: {}]
  %s3 = inlined_call_operand.vmem [shape: f32[2,96], index: 3, kind: input, shape index: {}]
  %s4 = inlined_call_operand.hbm [shape: f32[16,32], index: 4, kind: output, shape index: {0}]
  %s5 = inlined_call_operand.hbm [shape: f32[4,16,16], index: 5, kind: output, shape index: {1}]
  %6 = xla_tuple %s4, %s5
  %s7 = sld [smem:[#allocation0]]
  $region46: #{tpu_custom_call.1} parent=0
    _
  %s9 = ssub.s32 1, %s7
  %s10 = scalar_select 0, %s9, %s7
  $region1: #{tpu_custom_call.1} parent=0
    #allocation2 [shape = 'u8[8192]{0}', space=vmem, size = 0x2000, scoped, tag = 'input window, operand 0, single buffered']
    #allocation3 [shape = 's32[1]{0}', space=sflag, size = 0x4, scoped, tag = 'scoped memory for tpu_custom_call.1']
    #allocation4 [shape = 's32[1]{0}', space=sflag, size = 0x4, scoped, tag = 'scoped memory for tpu_custom_call.1']
    #allocation5 [shape = 'u8[8192]{0}', space=vmem, size = 0x2000, scoped, tag = 'input window, operand 1, single buffered']
    #allocation6 [shape = 's32[1]{0}', space=sflag, size = 0x4, scoped, tag = 'scoped memory for tpu_custom_call.1']
    #allocation7 [shape = 'u8[16384]{0}', space=vmem, size = 0x4000, scoped, tag = 'input window, operand 2, single buffered']
    #allocation8 [shape = 'u8[8192]{0}', space=vmem, size = 0x2000, scoped, tag = 'output window, operand 0, single buffered']
    #allocation9 [shape = 'u8[32768]{0}', space=vmem, size = 0x8000, scoped, tag = 'output window, operand 1, single buffered']
    #allocation10 [shape = 's32[1]{0}', space=sflag, size = 0x4, scoped, tag = 'scoped memory for tpu_custom_call.1']
    %11 = vsyncpa [#allocation3], 0
    %12 = vsyncpa [#allocation6], 0
    %13 = vsyncpa [#allocation4], 0
    %14 = vsyncpa [#allocation10], 0
    // Predicated region
    $region2: #{tpu_custom_call.1} parent=1 // pred_check
      _
    $region3: #{tpu_custom_call.1} parent=1 // pred_check_branch
      %16 = sbr.rel (0) target = $region5
    $region4: #{tpu_custom_call.1} parent=1 // pred_region
      %s18 = ssub.s32 256, 256
      %19 = vsyncadd [#allocation3], %s18
      %s20 = sshll.u32 [#allocation2], 4
      %s21 = int_to_ptr.vmem [resolvable:$true] %s20
      %26 = dma.hbm_to_vmem [thread:$0]  %s0, 256, %s21, [#allocation3], 128, 128, 8
    $region5: #{tpu_custom_call.1} parent=1 // pred_fallthru
      _
    // Predicated region
    $region6: #{tpu_custom_call.1} parent=1 // pred_check
      _
    $region7: #{tpu_custom_call.1} parent=1 // pred_check_branch
      %28 = sbr.rel (0) target = $region9
    $region8: #{tpu_custom_call.1} parent=1 // pred_region
      %s30 = ssub.s32 256, 256
      %31 = vsyncadd [#allocation6], %s30
      %s32 = sshll.u32 [#allocation5], 4
      %s33 = int_to_ptr.vmem [resolvable:$true] %s32
      %38 = dma.hbm_to_vmem [thread:$0]  %s1, 256, %s33, [#allocation6], 128, 128, 8
    $region9: #{tpu_custom_call.1} parent=1 // pred_fallthru
      _
    // Predicated region
    $region10: #{tpu_custom_call.1} parent=1 // pred_check
      _
    $region11: #{tpu_custom_call.1} parent=1 // pred_check_branch
      %40 = sbr.rel (0) target = $region13
    $region12: #{tpu_custom_call.1} parent=1 // pred_region
      %s42 = ssub.s32 512, 512
      %43 = vsyncadd [#allocation6], %s42
      %s44 = sshll.u32 [#allocation7], 4
      %s45 = int_to_ptr.vmem [resolvable:$true] %s44
      %50 = dma.hbm_to_vmem [thread:$0]  %s2, 512, %s45, [#allocation6], 128, 128, 8
    $region13: #{tpu_custom_call.1} parent=1 // pred_fallthru
      _
    // Predicated region
    $region14: #{tpu_custom_call.1} parent=1 // pred_check
      _
    $region15: #{tpu_custom_call.1} parent=1 // pred_check_branch
      %52 = sbr.rel (0) target = $region17
    $region16: #{tpu_custom_call.1} parent=1 // pred_region
      _
    $region17: #{tpu_custom_call.1} parent=1 // pred_fallthru
      _
    // Predicated region
    $region18: #{tpu_custom_call.1} parent=1 // pred_check
      _
    $region19: #{tpu_custom_call.1} parent=1 // pred_check_branch
      %54 = sbr.rel (0) target = $region21
    $region20: #{tpu_custom_call.1} parent=1 // pred_region
      %55 = dma.done [#allocation3], 256
    $region21: #{tpu_custom_call.1} parent=1 // pred_fallthru
      _
    // Predicated region
    $region22: #{tpu_custom_call.1} parent=1 // pred_check
      _
    $region23: #{tpu_custom_call.1} parent=1 // pred_check_branch
      %57 = sbr.rel (0) target = $region25
    $region24: #{tpu_custom_call.1} parent=1 // pred_region
      %58 = dma.done [#allocation6], 256
    $region25: #{tpu_custom_call.1} parent=1 // pred_fallthru
      _
    // Predicated region
    $region26: #{tpu_custom_call.1} parent=1 // pred_check
      _
    $region27: #{tpu_custom_call.1} parent=1 // pred_check_branch
      %60 = sbr.rel (0) target = $region29
    $region28: #{tpu_custom_call.1} parent=1 // pred_region
      %61 = dma.done [#allocation6], 512
    $region29: #{tpu_custom_call.1} parent=1 // pred_fallthru
      _
    %v62 = vld [vmem:[#allocation2] sm:$0xff]
    %v63 = vld [vmem:[#allocation2 + $0x8] sm:$0xff]
    %v64 = vld [vmem:[#allocation5] sm:$0xff]
    %v65 = vld [vmem:[#allocation5 + $0x8] sm:$0xff]
    %v66 = vld [vmem:[#allocation7] sm:$0xff]
    %v67 = vld [vmem:[#allocation7 + $0x8] sm:$0xff]
    %v68 = vld [vmem:[#allocation7 + $0x10] sm:$0xff]
    %v69 = vld [vmem:[#allocation7 + $0x18] sm:$0xff]
    %v70 = vld [vmem:[%s3] sm:$0x1]
    %v71 = vlaneseq
    %v72 = vshrl.u32 %v71, 7
    %v73 = vsub.s32 0, %v72
    %v74 = vrot.slane %v70, %v73
    %vm75 = vcmask 261120
    %v77 = vsel %vm75, %v62, 0
    %v80 = vsel %vm75, %v63, 0
    %82 = vmatprep.subr.mxu0 0.0
    %83 = vmatpush1.msra.mxu0 %v66
    %84 = vmatprep.subr.mxu0 0.0
    %85 = vmatpush1.msra.mxu0 %v67
    %86 = vmatprep.subr.mxu0 0.0
    %87 = vmatpush1.msra.mxu0 %v68
    %88 = vmatprep.subr.mxu0 0.0
    %89 = vmatpush1.msra.mxu0 %v69
    %90 = vmatprep.subr.mxu0 0.0
    %91 = vmatpush1.msra.mxu0 0.0
    %92 = vmatprep.subr.mxu0 0.0
    %93 = vmatpush1.msra.mxu0 0.0
    %94 = vmatprep.subr.mxu0 0.0
    %95 = vmatpush1.msra.mxu0 0.0
    %96 = vmatprep.subr.mxu0 0.0
    %97 = vmatpush1.msra.mxu0 0.0
    %98 = vmatprep.subr.mxu0 0.0
    %99 = vmatpush1.msra.mxu0 0.0
    %100 = vmatprep.subr.mxu0 0.0
    %101 = vmatpush1.msra.mxu0 0.0
    %102 = vmatprep.subr.mxu0 0.0
    %103 = vmatpush1.msra.mxu0 0.0
    %104 = vmatprep.subr.mxu0 0.0
    %105 = vmatpush1.msra.mxu0 0.0
    %106 = vmatprep.subr.mxu0 0.0
    %107 = vmatpush1.msra.mxu0 0.0
    %108 = vmatprep.subr.mxu0 0.0
    %109 = vmatpush1.msra.mxu0 0.0
    %110 = vmatprep.subr.mxu0 0.0
    %111 = vmatpush1.msra.mxu0 0.0
    %112 = vmatprep.subr.mxu0 0.0
    %113 = vmatpush1.msra.mxu0 0.0
    %114 = vmatprep.subr.mxu0 0.0
    %115 = vmatpush1.msra.mxu0 0.0
    %116 = vmatprep.subr.mxu0 0.0
    %117 = vmatpush1.msra.mxu0 0.0
    %118 = vmatprep.subr.mxu0 0.0
    %119 = vmatpush1.msra.mxu0 0.0
    %120 = vmatprep.subr.mxu0 0.0
    %121 = vmatpush1.msra.mxu0 0.0
    %122 = vmatprep.subr.mxu0 0.0
    %123 = vmatpush1.msra.mxu0 0.0
    %124 = vmatprep.subr.mxu0 0.0
    %125 = vmatpush1.msra.mxu0 0.0
    %126 = vmatprep.subr.mxu0 0.0
    %127 = vmatpush1.msra.mxu0 0.0
    %128 = vmatprep.subr.mxu0 0.0
    %129 = vmatpush1.msra.mxu0 0.0
    %130 = vmatprep.subr.mxu0 0.0
    %131 = vmatpush1.msra.mxu0 0.0
    %132 = vmatprep.subr.mxu0 0.0
    %133 = vmatpush1.msra.mxu0 0.0
    %134 = vmatprep.subr.mxu0 0.0
    %135 = vmatpush1.msra.mxu0 0.0
    %136 = vmatprep.subr.mxu0 0.0
    %137 = vmatpush1.msra.mxu0 0.0
    %138 = vmatprep.subr.mxu0 0.0
    %139 = vmatpush1.msra.mxu0 0.0
    %140 = vmatprep.subr.mxu0 0.0
    %141 = vmatpush1.msra.mxu0 0.0
    %142 = vmatprep.subr.mxu0 0.0
    %143 = vmatpush1.msra.mxu0 0.0
    %144 = vmatprep.subr.mxu0 0.0
    %145 = vmatpush1.msra.mxu0 0.0
    %146 = vmatprep.mubr.f32.mxu0 0.0
    %147 = vmatmul.mubr.f32.gmra.mrb[0].mxu0 %v77
    %v148 = vpop.f32.mrb[0].mxu0
    %v149 = vadd.f32 %v74, %v148
    %v150 = vpop.f32.mrb[0].mxu0
    %151 = vmatprep.mubr.f32.mxu0 0.0
    %152 = vmatmul.mubr.f32.gmra.mrb[0].mxu0 %v80
    %v153 = vpop.f32.mrb[0].mxu0
    %v154 = vadd.f32 %v74, %v153
    %v155 = vpop.f32.mrb[0].mxu0
    %156 = vdwg.mxu0
    %159 = vrot.lane.b32.xlu0 %v149, 96
    %v160 = vpop.permute.xlu0 %159
    %161 = vrot.lane.b32.xlu0 %v154, 96
    %v162 = vpop.permute.xlu0 %161
    %vm163 = vcmask 64512
    %v164 = vsel %vm163, %v149, 0
    %v166 = vsel %vm163, %v154, 0
    %v168 = vsel %vm163, %v160, 0
    %v170 = vsel %vm163, %v162, 0
    %172 = vmatprep.subr.mxu0 0.0
    %173 = vmatpush1.xpose.msra.mxu0 %v168
    %174 = vmatprep.subr.mxu0 0.0
    %175 = vmatpush1.xpose.msra.mxu0 %v170
    %176 = vmatprep.subr.mxu0 0.0
    %177 = vmatpush1.xpose.msra.mxu0 0.0
    %178 = vmatprep.subr.mxu0 0.0
    %179 = vmatpush1.xpose.msra.mxu0 0.0
    %180 = vmatprep.subr.mxu0 0.0
    %181 = vmatpush1.xpose.msra.mxu0 0.0
    %182 = vmatprep.subr.mxu0 0.0
    %183 = vmatpush1.xpose.msra.mxu0 0.0
    %184 = vmatprep.subr.mxu0 0.0
    %185 = vmatpush1.xpose.msra.mxu0 0.0
    %186 = vmatprep.subr.mxu0 0.0
    %187 = vmatpush1.xpose.msra.mxu0 0.0
    %188 = vmatprep.subr.mxu0 0.0
    %189 = vmatpush1.xpose.msra.mxu0 0.0
    %190 = vmatprep.subr.mxu0 0.0
    %191 = vmatpush1.xpose.msra.mxu0 0.0
    %192 = vmatprep.subr.mxu0 0.0
    %193 = vmatpush1.xpose.msra.mxu0 0.0
    %194 = vmatprep.subr.mxu0 0.0
    %195 = vmatpush1.xpose.msra.mxu0 0.0
    %196 = vmatprep.subr.mxu0 0.0
    %197 = vmatpush1.xpose.msra.mxu0 0.0
    %198 = vmatprep.subr.mxu0 0.0
    %199 = vmatpush1.xpose.msra.mxu0 0.0
    %200 = vmatprep.subr.mxu0 0.0
    %201 = vmatpush1.xpose.msra.mxu0 0.0
    %202 = vmatprep.subr.mxu0 0.0
    %203 = vmatpush1.xpose.msra.mxu0 0.0
    %204 = vmatprep.subr.mxu0 0.0
    %205 = vmatpush1.xpose.msra.mxu0 0.0
    %206 = vmatprep.subr.mxu0 0.0
    %207 = vmatpush1.xpose.msra.mxu0 0.0
    %208 = vmatprep.subr.mxu0 0.0
    %209 = vmatpush1.xpose.msra.mxu0 0.0
    %210 = vmatprep.subr.mxu0 0.0
    %211 = vmatpush1.xpose.msra.mxu0 0.0
    %212 = vmatprep.subr.mxu0 0.0
    %213 = vmatpush1.xpose.msra.mxu0 0.0
    %214 = vmatprep.subr.mxu0 0.0
    %215 = vmatpush1.xpose.msra.mxu0 0.0
    %216 = vmatprep.subr.mxu0 0.0
    %217 = vmatpush1.xpose.msra.mxu0 0.0
    %218 = vmatprep.subr.mxu0 0.0
    %219 = vmatpush1.xpose.msra.mxu0 0.0
    %220 = vmatprep.subr.mxu0 0.0
    %221 = vmatpush1.xpose.msra.mxu0 0.0
    %222 = vmatprep.subr.mxu0 0.0
    %223 = vmatpush1.xpose.msra.mxu0 0.0
    %224 = vmatprep.subr.mxu0 0.0
    %225 = vmatpush1.xpose.msra.mxu0 0.0
    %226 = vmatprep.subr.mxu0 0.0
    %227 = vmatpush1.xpose.msra.mxu0 0.0
    %228 = vmatprep.subr.mxu0 0.0
    %229 = vmatpush1.xpose.msra.mxu0 0.0
    %230 = vmatprep.subr.mxu0 0.0
    %231 = vmatpush1.xpose.msra.mxu0 0.0
    %232 = vmatprep.subr.mxu0 0.0
    %233 = vmatpush1.xpose.msra.mxu0 0.0
    %234 = vmatprep.subr.mxu0 0.0
    %235 = vmatpush1.xpose.msra.mxu0 0.0
    %236 = vmatprep.mubr.f32.mxu0 0.0
    %237 = vmatmul.mubr.f32.gmra.mrb[0].mxu0 %v164
    %v238 = vpop.f32.mrb[0].mxu0
    %v239 = vadd.f32 %v64, %v238
    %v240 = vpop.f32.mrb[0].mxu0
    %241 = vmatprep.mubr.f32.mxu0 0.0
    %242 = vmatmul.mubr.f32.gmra.mrb[0].mxu0 %v166
    %v243 = vpop.f32.mrb[0].mxu0
    %v244 = vadd.f32 %v65, %v243
    %v245 = vpop.f32.mrb[0].mxu0
    %246 = vdwg.mxu0
    %vm247 = vcmask 130048
    %v248 = vsel %vm247, %v239, -inf
    %249 = vmax.xlane.f32.xlu0 %v248
    %v250 = vpop.xlane.xlu0 %249
    %v251 = vsel %vm247, %v244, -inf
    %252 = vmax.xlane.f32.xlu0 %v251
    %v253 = vpop.xlane.xlu0 %252
    %v254 = vsub.f32 %v239, %v250
    %v255 = vsub.f32 %v244, %v253
    %v256 = vmul.f32 %v254, 1.442695
    %v257 = vpow.pop %v256
    %v258 = vmul.f32 %v255, 1.442695
    %v259 = vpow.pop %v258
    %v260 = vsel %vm247, %v257, 0.0
    %261 = vadd.xlane.f32.xlu0 %v260
    %v262 = vpop.xlane.xlu0 %261
    %v263 = vsel %vm247, %v259, 0.0
    %264 = vadd.xlane.f32.xlu0 %v263
    %v265 = vpop.xlane.xlu0 %264
    %v266 = vrcp.pop %v262
    %v267 = vrcp.pop %v265
    %v268 = vmul.f32 %v257, %v266
    %v269 = vmul.f32 %v259, %v267
    %270 = vst.msk [vmem:[#allocation9] sm:$0xff] %vm247, %v268
    %271 = vst.msk [vmem:[#allocation9 + $0x8] sm:$0xff] %vm247, %v269
    %272 = vrot.lane.b32.xlu0 %v149, 64
    %v273 = vpop.permute.xlu0 %272
    %274 = vrot.lane.b32.xlu0 %v154, 64
    %v275 = vpop.permute.xlu0 %274
    %v279 = vsel %vm247, %v268, 0
    %v282 = vsel %vm247, %v269, 0
    %284 = vmatprep.subr.mxu0 0.0
    %285 = vmatpush1.msra.mxu0 %v273
    %286 = vmatprep.subr.mxu0 0.0
    %287 = vmatpush1.msra.mxu0 %v275
    %288 = vmatprep.subr.mxu0 0.0
    %289 = vmatpush1.msra.mxu0 0.0
    %290 = vmatprep.subr.mxu0 0.0
    %291 = vmatpush1.msra.mxu0 0.0
    %292 = vmatprep.subr.mxu0 0.0
    %293 = vmatpush1.msra.mxu0 0.0
    %294 = vmatprep.subr.mxu0 0.0
    %295 = vmatpush1.msra.mxu0 0.0
    %296 = vmatprep.subr.mxu0 0.0
    %297 = vmatpush1.msra.mxu0 0.0
    %298 = vmatprep.subr.mxu0 0.0
    %299 = vmatpush1.msra.mxu0 0.0
    %300 = vmatprep.subr.mxu0 0.0
    %301 = vmatpush1.msra.mxu0 0.0
    %302 = vmatprep.subr.mxu0 0.0
    %303 = vmatpush1.msra.mxu0 0.0
    %304 = vmatprep.subr.mxu0 0.0
    %305 = vmatpush1.msra.mxu0 0.0
    %306 = vmatprep.subr.mxu0 0.0
    %307 = vmatpush1.msra.mxu0 0.0
    %308 = vmatprep.subr.mxu0 0.0
    %309 = vmatpush1.msra.mxu0 0.0
    %310 = vmatprep.subr.mxu0 0.0
    %311 = vmatpush1.msra.mxu0 0.0
    %312 = vmatprep.subr.mxu0 0.0
    %313 = vmatpush1.msra.mxu0 0.0
    %314 = vmatprep.subr.mxu0 0.0
    %315 = vmatpush1.msra.mxu0 0.0
    %316 = vmatprep.subr.mxu0 0.0
    %317 = vmatpush1.msra.mxu0 0.0
    %318 = vmatprep.subr.mxu0 0.0
    %319 = vmatpush1.msra.mxu0 0.0
    %320 = vmatprep.subr.mxu0 0.0
    %321 = vmatpush1.msra.mxu0 0.0
    %322 = vmatprep.subr.mxu0 0.0
    %323 = vmatpush1.msra.mxu0 0.0
    %324 = vmatprep.subr.mxu0 0.0
    %325 = vmatpush1.msra.mxu0 0.0
    %326 = vmatprep.subr.mxu0 0.0
    %327 = vmatpush1.msra.mxu0 0.0
    %328 = vmatprep.subr.mxu0 0.0
    %329 = vmatpush1.msra.mxu0 0.0
    %330 = vmatprep.subr.mxu0 0.0
    %331 = vmatpush1.msra.mxu0 0.0
    %332 = vmatprep.subr.mxu0 0.0
    %333 = vmatpush1.msra.mxu0 0.0
    %334 = vmatprep.subr.mxu0 0.0
    %335 = vmatpush1.msra.mxu0 0.0
    %336 = vmatprep.subr.mxu0 0.0
    %337 = vmatpush1.msra.mxu0 0.0
    %338 = vmatprep.subr.mxu0 0.0
    %339 = vmatpush1.msra.mxu0 0.0
    %340 = vmatprep.subr.mxu0 0.0
    %341 = vmatpush1.msra.mxu0 0.0
    %342 = vmatprep.subr.mxu0 0.0
    %343 = vmatpush1.msra.mxu0 0.0
    %344 = vmatprep.subr.mxu0 0.0
    %345 = vmatpush1.msra.mxu0 0.0
    %346 = vmatprep.subr.mxu0 0.0
    %347 = vmatpush1.msra.mxu0 0.0
    %348 = vmatprep.mubr.f32.mxu0 0.0
    %349 = vmatmul.mubr.f32.gmra.mrb[0].mxu0 %v279
    %v350 = vpop.f32.mrb[0].mxu0
    %v351 = vadd.f32 0.0, %v350
    %v352 = vpop.f32.mrb[0].mxu0
    %353 = vmatprep.mubr.f32.mxu0 0.0
    %354 = vmatmul.mubr.f32.gmra.mrb[0].mxu0 %v282
    %v355 = vpop.f32.mrb[0].mxu0
    %v356 = vadd.f32 0.0, %v355
    %v357 = vpop.f32.mrb[0].mxu0
    %358 = vdwg.mxu0
    %359 = vrot.lane.b32.xlu0 %v149, 120
    %v360 = vpop.permute.xlu0 %359
    %361 = vrot.lane.b32.xlu0 %v154, 120
    %v362 = vpop.permute.xlu0 %361
    %363 = vrot.lane.b32.xlu0 %v149, 88
    %v364 = vpop.permute.xlu0 %363
    %365 = vrot.lane.b32.xlu0 %v154, 88
    %v366 = vpop.permute.xlu0 %365
    %v367 = vsel %vm163, %v360, 0
    %v369 = vsel %vm163, %v362, 0
    %v371 = vsel %vm163, %v364, 0
    %v373 = vsel %vm163, %v366, 0
    %375 = vmatprep.subr.mxu0 0.0
    %376 = vmatpush1.xpose.msra.mxu0 %v371
    %377 = vmatprep.subr.mxu0 0.0
    %378 = vmatpush1.xpose.msra.mxu0 %v373
    %379 = vmatprep.subr.mxu0 0.0
    %380 = vmatpush1.xpose.msra.mxu0 0.0
    %381 = vmatprep.subr.mxu0 0.0
    %382 = vmatpush1.xpose.msra.mxu0 0.0
    %383 = vmatprep.subr.mxu0 0.0
    %384 = vmatpush1.xpose.msra.mxu0 0.0
    %385 = vmatprep.subr.mxu0 0.0
    %386 = vmatpush1.xpose.msra.mxu0 0.0
    %387 = vmatprep.subr.mxu0 0.0
    %388 = vmatpush1.xpose.msra.mxu0 0.0
    %389 = vmatprep.subr.mxu0 0.0
    %390 = vmatpush1.xpose.msra.mxu0 0.0
    %391 = vmatprep.subr.mxu0 0.0
    %392 = vmatpush1.xpose.msra.mxu0 0.0
    %393 = vmatprep.subr.mxu0 0.0
    %394 = vmatpush1.xpose.msra.mxu0 0.0
    %395 = vmatprep.subr.mxu0 0.0
    %396 = vmatpush1.xpose.msra.mxu0 0.0
    %397 = vmatprep.subr.mxu0 0.0
    %398 = vmatpush1.xpose.msra.mxu0 0.0
    %399 = vmatprep.subr.mxu0 0.0
    %400 = vmatpush1.xpose.msra.mxu0 0.0
    %401 = vmatprep.subr.mxu0 0.0
    %402 = vmatpush1.xpose.msra.mxu0 0.0
    %403 = vmatprep.subr.mxu0 0.0
    %404 = vmatpush1.xpose.msra.mxu0 0.0
    %405 = vmatprep.subr.mxu0 0.0
    %406 = vmatpush1.xpose.msra.mxu0 0.0
    %407 = vmatprep.subr.mxu0 0.0
    %408 = vmatpush1.xpose.msra.mxu0 0.0
    %409 = vmatprep.subr.mxu0 0.0
    %410 = vmatpush1.xpose.msra.mxu0 0.0
    %411 = vmatprep.subr.mxu0 0.0
    %412 = vmatpush1.xpose.msra.mxu0 0.0
    %413 = vmatprep.subr.mxu0 0.0
    %414 = vmatpush1.xpose.msra.mxu0 0.0
    %415 = vmatprep.subr.mxu0 0.0
    %416 = vmatpush1.xpose.msra.mxu0 0.0
    %417 = vmatprep.subr.mxu0 0.0
    %418 = vmatpush1.xpose.msra.mxu0 0.0
    %419 = vmatprep.subr.mxu0 0.0
    %420 = vmatpush1.xpose.msra.mxu0 0.0
    %421 = vmatprep.subr.mxu0 0.0
    %422 = vmatpush1.xpose.msra.mxu0 0.0
    %423 = vmatprep.subr.mxu0 0.0
    %424 = vmatpush1.xpose.msra.mxu0 0.0
    %425 = vmatprep.subr.mxu0 0.0
    %426 = vmatpush1.xpose.msra.mxu0 0.0
    %427 = vmatprep.subr.mxu0 0.0
    %428 = vmatpush1.xpose.msra.mxu0 0.0
    %429 = vmatprep.subr.mxu0 0.0
    %430 = vmatpush1.xpose.msra.mxu0 0.0
    %431 = vmatprep.subr.mxu0 0.0
    %432 = vmatpush1.xpose.msra.mxu0 0.0
    %433 = vmatprep.subr.mxu0 0.0
    %434 = vmatpush1.xpose.msra.mxu0 0.0
    %435 = vmatprep.subr.mxu0 0.0
    %436 = vmatpush1.xpose.msra.mxu0 0.0
    %437 = vmatprep.subr.mxu0 0.0
    %438 = vmatpush1.xpose.msra.mxu0 0.0
    %439 = vmatprep.mubr.f32.mxu0 0.0
    %440 = vmatmul.mubr.f32.gmra.mrb[0].mxu0 %v367
    %v441 = vpop.f32.mrb[0].mxu0
    %v442 = vadd.f32 %v64, %v441
    %v443 = vpop.f32.mrb[0].mxu0
    %444 = vmatprep.mubr.f32.mxu0 0.0
    %445 = vmatmul.mubr.f32.gmra.mrb[0].mxu0 %v369
    %v446 = vpop.f32.mrb[0].mxu0
    %v447 = vadd.f32 %v65, %v446
    %v448 = vpop.f32.mrb[0].mxu0
    %449 = vdwg.mxu0
    %v450 = vsel %vm247, %v442, -inf
    %451 = vmax.xlane.f32.xlu0 %v450
    %v452 = vpop.xlane.xlu0 %451
    %v453 = vsel %vm247, %v447, -inf
    %454 = vmax.xlane.f32.xlu0 %v453
    %v455 = vpop.xlane.xlu0 %454
    %v456 = vsub.f32 %v442, %v452
    %v457 = vsub.f32 %v447, %v455
    %v458 = vmul.f32 %v456, 1.442695
    %v459 = vpow.pop %v458
    %v460 = vmul.f32 %v457, 1.442695
    %v461 = vpow.pop %v460
    %v462 = vsel %vm247, %v459, 0.0
    %463 = vadd.xlane.f32.xlu0 %v462
    %v464 = vpop.xlane.xlu0 %463
    %v465 = vsel %vm247, %v461, 0.0
    %466 = vadd.xlane.f32.xlu0 %v465
    %v467 = vpop.xlane.xlu0 %466
    %v468 = vrcp.pop %v464
    %v469 = vrcp.pop %v467
    %v470 = vmul.f32 %v459, %v468
    %v471 = vmul.f32 %v461, %v469
    %s472 = scalar_lea.vmem [#allocation9], 16
    %473 = vst.msk [vmem:[%s472] sm:$0xff] %vm247, %v470
    %474 = vst.msk [vmem:[%s472 + $0x8] sm:$0xff] %vm247, %v471
    %475 = vrot.lane.b32.xlu0 %v149, 56
    %v476 = vpop.permute.xlu0 %475
    %477 = vrot.lane.b32.xlu0 %v154, 56
    %v478 = vpop.permute.xlu0 %477
    %v482 = vsel %vm247, %v470, 0
    %v485 = vsel %vm247, %v471, 0
    %487 = vmatprep.subr.mxu0 0.0
    %488 = vmatpush1.msra.mxu0 %v476
    %489 = vmatprep.subr.mxu0 0.0
    %490 = vmatpush1.msra.mxu0 %v478
    %491 = vmatprep.subr.mxu0 0.0
    %492 = vmatpush1.msra.mxu0 0.0
    %493 = vmatprep.subr.mxu0 0.0
    %494 = vmatpush1.msra.mxu0 0.0
    %495 = vmatprep.subr.mxu0 0.0
    %496 = vmatpush1.msra.mxu0 0.0
    %497 = vmatprep.subr.mxu0 0.0
    %498 = vmatpush1.msra.mxu0 0.0
    %499 = vmatprep.subr.mxu0 0.0
    %500 = vmatpush1.msra.mxu0 0.0
    %501 = vmatprep.subr.mxu0 0.0
    %502 = vmatpush1.msra.mxu0 0.0
    %503 = vmatprep.subr.mxu0 0.0
    %504 = vmatpush1.msra.mxu0 0.0
    %505 = vmatprep.subr.mxu0 0.0
    %506 = vmatpush1.msra.mxu0 0.0
    %507 = vmatprep.subr.mxu0 0.0
    %508 = vmatpush1.msra.mxu0 0.0
    %509 = vmatprep.subr.mxu0 0.0
    %510 = vmatpush1.msra.mxu0 0.0
    %511 = vmatprep.subr.mxu0 0.0
    %512 = vmatpush1.msra.mxu0 0.0
    %513 = vmatprep.subr.mxu0 0.0
    %514 = vmatpush1.msra.mxu0 0.0
    %515 = vmatprep.subr.mxu0 0.0
    %516 = vmatpush1.msra.mxu0 0.0
    %517 = vmatprep.subr.mxu0 0.0
    %518 = vmatpush1.msra.mxu0 0.0
    %519 = vmatprep.subr.mxu0 0.0
    %520 = vmatpush1.msra.mxu0 0.0
    %521 = vmatprep.subr.mxu0 0.0
    %522 = vmatpush1.msra.mxu0 0.0
    %523 = vmatprep.subr.mxu0 0.0
    %524 = vmatpush1.msra.mxu0 0.0
    %525 = vmatprep.subr.mxu0 0.0
    %526 = vmatpush1.msra.mxu0 0.0
    %527 = vmatprep.subr.mxu0 0.0
    %528 = vmatpush1.msra.mxu0 0.0
    %529 = vmatprep.subr.mxu0 0.0
    %530 = vmatpush1.msra.mxu0 0.0
    %531 = vmatprep.subr.mxu0 0.0
    %532 = vmatpush1.msra.mxu0 0.0
    %533 = vmatprep.subr.mxu0 0.0
    %534 = vmatpush1.msra.mxu0 0.0
    %535 = vmatprep.subr.mxu0 0.0
    %536 = vmatpush1.msra.mxu0 0.0
    %537 = vmatprep.subr.mxu0 0.0
    %538 = vmatpush1.msra.mxu0 0.0
    %539 = vmatprep.subr.mxu0 0.0
    %540 = vmatpush1.msra.mxu0 0.0
    %541 = vmatprep.subr.mxu0 0.0
    %542 = vmatpush1.msra.mxu0 0.0
    %543 = vmatprep.subr.mxu0 0.0
    %544 = vmatpush1.msra.mxu0 0.0
    %545 = vmatprep.subr.mxu0 0.0
    %546 = vmatpush1.msra.mxu0 0.0
    %547 = vmatprep.subr.mxu0 0.0
    %548 = vmatpush1.msra.mxu0 0.0
    %549 = vmatprep.subr.mxu0 0.0
    %550 = vmatpush1.msra.mxu0 0.0
    %551 = vmatprep.mubr.f32.mxu0 0.0
    %552 = vmatmul.mubr.f32.gmra.mrb[0].mxu0 %v482
    %v553 = vpop.f32.mrb[0].mxu0
    %v554 = vadd.f32 0.0, %v553
    %v555 = vpop.f32.mrb[0].mxu0
    %556 = vmatprep.mubr.f32.mxu0 0.0
    %557 = vmatmul.mubr.f32.gmra.mrb[0].mxu0 %v485
    %v558 = vpop.f32.mrb[0].mxu0
    %v559 = vadd.f32 0.0, %v558
    %v560 = vpop.f32.mrb[0].mxu0
    %561 = vdwg.mxu0
    %562 = vrot.lane.b32.xlu0 %v149, 112
    %v563 = vpop.permute.xlu0 %562
    %564 = vrot.lane.b32.xlu0 %v154, 112
    %v565 = vpop.permute.xlu0 %564
    %566 = vrot.lane.b32.xlu0 %v149, 80
    %v567 = vpop.permute.xlu0 %566
    %568 = vrot.lane.b32.xlu0 %v154, 80
    %v569 = vpop.permute.xlu0 %568
    %v570 = vsel %vm163, %v563, 0
    %v572 = vsel %vm163, %v565, 0
    %v574 = vsel %vm163, %v567, 0
    %v576 = vsel %vm163, %v569, 0
    %578 = vmatprep.subr.mxu0 0.0
    %579 = vmatpush1.xpose.msra.mxu0 %v574
    %580 = vmatprep.subr.mxu0 0.0
    %581 = vmatpush1.xpose.msra.mxu0 %v576
    %582 = vmatprep.subr.mxu0 0.0
    %583 = vmatpush1.xpose.msra.mxu0 0.0
    %584 = vmatprep.subr.mxu0 0.0
    %585 = vmatpush1.xpose.msra.mxu0 0.0
    %586 = vmatprep.subr.mxu0 0.0
    %587 = vmatpush1.xpose.msra.mxu0 0.0
    %588 = vmatprep.subr.mxu0 0.0
    %589 = vmatpush1.xpose.msra.mxu0 0.0
    %590 = vmatprep.subr.mxu0 0.0
    %591 = vmatpush1.xpose.msra.mxu0 0.0
    %592 = vmatprep.subr.mxu0 0.0
    %593 = vmatpush1.xpose.msra.mxu0 0.0
    %594 = vmatprep.subr.mxu0 0.0
    %595 = vmatpush1.xpose.msra.mxu0 0.0
    %596 = vmatprep.subr.mxu0 0.0
    %597 = vmatpush1.xpose.msra.mxu0 0.0
    %598 = vmatprep.subr.mxu0 0.0
    %599 = vmatpush1.xpose.msra.mxu0 0.0
    %600 = vmatprep.subr.mxu0 0.0
    %601 = vmatpush1.xpose.msra.mxu0 0.0
    %602 = vmatprep.subr.mxu0 0.0
    %603 = vmatpush1.xpose.msra.mxu0 0.0
    %604 = vmatprep.subr.mxu0 0.0
    %605 = vmatpush1.xpose.msra.mxu0 0.0
    %606 = vmatprep.subr.mxu0 0.0
    %607 = vmatpush1.xpose.msra.mxu0 0.0
    %608 = vmatprep.subr.mxu0 0.0
    %609 = vmatpush1.xpose.msra.mxu0 0.0
    %610 = vmatprep.subr.mxu0 0.0
    %611 = vmatpush1.xpose.msra.mxu0 0.0
    %612 = vmatprep.subr.mxu0 0.0
    %613 = vmatpush1.xpose.msra.mxu0 0.0
    %614 = vmatprep.subr.mxu0 0.0
    %615 = vmatpush1.xpose.msra.mxu0 0.0
    %616 = vmatprep.subr.mxu0 0.0
    %617 = vmatpush1.xpose.msra.mxu0 0.0
    %618 = vmatprep.subr.mxu0 0.0
    %619 = vmatpush1.xpose.msra.mxu0 0.0
    %620 = vmatprep.subr.mxu0 0.0
    %621 = vmatpush1.xpose.msra.mxu0 0.0
    %622 = vmatprep.subr.mxu0 0.0
    %623 = vmatpush1.xpose.msra.mxu0 0.0
    %624 = vmatprep.subr.mxu0 0.0
    %625 = vmatpush1.xpose.msra.mxu0 0.0
    %626 = vmatprep.subr.mxu0 0.0
    %627 = vmatpush1.xpose.msra.mxu0 0.0
    %628 = vmatprep.subr.mxu0 0.0
    %629 = vmatpush1.xpose.msra.mxu0 0.0
    %630 = vmatprep.subr.mxu0 0.0
    %631 = vmatpush1.xpose.msra.mxu0 0.0
    %632 = vmatprep.subr.mxu0 0.0
    %633 = vmatpush1.xpose.msra.mxu0 0.0
    %634 = vmatprep.subr.mxu0 0.0
    %635 = vmatpush1.xpose.msra.mxu0 0.0
    %636 = vmatprep.subr.mxu0 0.0
    %637 = vmatpush1.xpose.msra.mxu0 0.0
    %638 = vmatprep.subr.mxu0 0.0
    %639 = vmatpush1.xpose.msra.mxu0 0.0
    %640 = vmatprep.subr.mxu0 0.0
    %641 = vmatpush1.xpose.msra.mxu0 0.0
    %642 = vmatprep.mubr.f32.mxu0 0.0
    %643 = vmatmul.mubr.f32.gmra.mrb[0].mxu0 %v570
    %v644 = vpop.f32.mrb[0].mxu0
    %v645 = vadd.f32 %v64, %v644
    %v646 = vpop.f32.mrb[0].mxu0
    %647 = vmatprep.mubr.f32.mxu0 0.0
    %648 = vmatmul.mubr.f32.gmra.mrb[0].mxu0 %v572
    %v649 = vpop.f32.mrb[0].mxu0
    %v650 = vadd.f32 %v65, %v649
    %v651 = vpop.f32.mrb[0].mxu0
    %652 = vdwg.mxu0
    %v653 = vsel %vm247, %v645, -inf
    %654 = vmax.xlane.f32.xlu0 %v653
    %v655 = vpop.xlane.xlu0 %654
    %v656 = vsel %vm247, %v650, -inf
    %657 = vmax.xlane.f32.xlu0 %v656
    %v658 = vpop.xlane.xlu0 %657
    %v659 = vsub.f32 %v645, %v655
    %v660 = vsub.f32 %v650, %v658
    %v661 = vmul.f32 %v659, 1.442695
    %v662 = vpow.pop %v661
    %v663 = vmul.f32 %v660, 1.442695
    %v664 = vpow.pop %v663
    %v665 = vsel %vm247, %v662, 0.0
    %666 = vadd.xlane.f32.xlu0 %v665
    %v667 = vpop.xlane.xlu0 %666
    %v668 = vsel %vm247, %v664, 0.0
    %669 = vadd.xlane.f32.xlu0 %v668
    %v670 = vpop.xlane.xlu0 %669
    %v671 = vrcp.pop %v667
    %v672 = vrcp.pop %v670
    %v673 = vmul.f32 %v662, %v671
    %v674 = vmul.f32 %v664, %v672
    %s675 = scalar_lea.vmem [#allocation9], 32
    %676 = vst.msk [vmem:[%s675] sm:$0xff] %vm247, %v673
    %677 = vst.msk [vmem:[%s675 + $0x8] sm:$0xff] %vm247, %v674
    %678 = vrot.lane.b32.xlu0 %v149, 48
    %v679 = vpop.permute.xlu0 %678
    %680 = vrot.lane.b32.xlu0 %v154, 48
    %v681 = vpop.permute.xlu0 %680
    %v685 = vsel %vm247, %v673, 0
    %v688 = vsel %vm247, %v674, 0
    %690 = vmatprep.subr.mxu0 0.0
    %691 = vmatpush1.msra.mxu0 %v679
    %692 = vmatprep.subr.mxu0 0.0
    %693 = vmatpush1.msra.mxu0 %v681
    %694 = vmatprep.subr.mxu0 0.0
    %695 = vmatpush1.msra.mxu0 0.0
    %696 = vmatprep.subr.mxu0 0.0
    %697 = vmatpush1.msra.mxu0 0.0
    %698 = vmatprep.subr.mxu0 0.0
    %699 = vmatpush1.msra.mxu0 0.0
    %700 = vmatprep.subr.mxu0 0.0
    %701 = vmatpush1.msra.mxu0 0.0
    %702 = vmatprep.subr.mxu0 0.0
    %703 = vmatpush1.msra.mxu0 0.0
    %704 = vmatprep.subr.mxu0 0.0
    %705 = vmatpush1.msra.mxu0 0.0
    %706 = vmatprep.subr.mxu0 0.0
    %707 = vmatpush1.msra.mxu0 0.0
    %708 = vmatprep.subr.mxu0 0.0
    %709 = vmatpush1.msra.mxu0 0.0
    %710 = vmatprep.subr.mxu0 0.0
    %711 = vmatpush1.msra.mxu0 0.0
    %712 = vmatprep.subr.mxu0 0.0
    %713 = vmatpush1.msra.mxu0 0.0
    %714 = vmatprep.subr.mxu0 0.0
    %715 = vmatpush1.msra.mxu0 0.0
    %716 = vmatprep.subr.mxu0 0.0
    %717 = vmatpush1.msra.mxu0 0.0
    %718 = vmatprep.subr.mxu0 0.0
    %719 = vmatpush1.msra.mxu0 0.0
    %720 = vmatprep.subr.mxu0 0.0
    %721 = vmatpush1.msra.mxu0 0.0
    %722 = vmatprep.subr.mxu0 0.0
    %723 = vmatpush1.msra.mxu0 0.0
    %724 = vmatprep.subr.mxu0 0.0
    %725 = vmatpush1.msra.mxu0 0.0
    %726 = vmatprep.subr.mxu0 0.0
    %727 = vmatpush1.msra.mxu0 0.0
    %728 = vmatprep.subr.mxu0 0.0
    %729 = vmatpush1.msra.mxu0 0.0
    %730 = vmatprep.subr.mxu0 0.0
    %731 = vmatpush1.msra.mxu0 0.0
    %732 = vmatprep.subr.mxu0 0.0
    %733 = vmatpush1.msra.mxu0 0.0
    %734 = vmatprep.subr.mxu0 0.0
    %735 = vmatpush1.msra.mxu0 0.0
    %736 = vmatprep.subr.mxu0 0.0
    %737 = vmatpush1.msra.mxu0 0.0
    %738 = vmatprep.subr.mxu0 0.0
    %739 = vmatpush1.msra.mxu0 0.0
    %740 = vmatprep.subr.mxu0 0.0
    %741 = vmatpush1.msra.mxu0 0.0
    %742 = vmatprep.subr.mxu0 0.0
    %743 = vmatpush1.msra.mxu0 0.0
    %744 = vmatprep.subr.mxu0 0.0
    %745 = vmatpush1.msra.mxu0 0.0
    %746 = vmatprep.subr.mxu0 0.0
    %747 = vmatpush1.msra.mxu0 0.0
    %748 = vmatprep.subr.mxu0 0.0
    %749 = vmatpush1.msra.mxu0 0.0
    %750 = vmatprep.subr.mxu0 0.0
    %751 = vmatpush1.msra.mxu0 0.0
    %752 = vmatprep.subr.mxu0 0.0
    %753 = vmatpush1.msra.mxu0 0.0
    %754 = vmatprep.mubr.f32.mxu0 0.0
    %755 = vmatmul.mubr.f32.gmra.mrb[0].mxu0 %v685
    %v756 = vpop.f32.mrb[0].mxu0
    %v757 = vadd.f32 0.0, %v756
    %v758 = vpop.f32.mrb[0].mxu0
    %759 = vmatprep.mubr.f32.mxu0 0.0
    %760 = vmatmul.mubr.f32.gmra.mrb[0].mxu0 %v688
    %v761 = vpop.f32.mrb[0].mxu0
    %v762 = vadd.f32 0.0, %v761
    %v763 = vpop.f32.mrb[0].mxu0
    %764 = vdwg.mxu0
    %765 = vrot.lane.b32.xlu0 %v149, 104
    %v766 = vpop.permute.xlu0 %765
    %767 = vrot.lane.b32.xlu0 %v154, 104
    %v768 = vpop.permute.xlu0 %767
    %769 = vrot.lane.b32.xlu0 %v149, 72
    %v770 = vpop.permute.xlu0 %769
    %771 = vrot.lane.b32.xlu0 %v154, 72
    %v772 = vpop.permute.xlu0 %771
    %v773 = vsel %vm163, %v766, 0
    %v775 = vsel %vm163, %v768, 0
    %v777 = vsel %vm163, %v770, 0
    %v779 = vsel %vm163, %v772, 0
    %781 = vmatprep.subr.mxu0 0.0
    %782 = vmatpush1.xpose.msra.mxu0 %v777
    %783 = vmatprep.subr.mxu0 0.0
    %784 = vmatpush1.xpose.msra.mxu0 %v779
    %785 = vmatprep.subr.mxu0 0.0
    %786 = vmatpush1.xpose.msra.mxu0 0.0
    %787 = vmatprep.subr.mxu0 0.0
    %788 = vmatpush1.xpose.msra.mxu0 0.0
    %789 = vmatprep.subr.mxu0 0.0
    %790 = vmatpush1.xpose.msra.mxu0 0.0
    %791 = vmatprep.subr.mxu0 0.0
    %792 = vmatpush1.xpose.msra.mxu0 0.0
    %793 = vmatprep.subr.mxu0 0.0
    %794 = vmatpush1.xpose.msra.mxu0 0.0
    %795 = vmatprep.subr.mxu0 0.0
    %796 = vmatpush1.xpose.msra.mxu0 0.0
    %797 = vmatprep.subr.mxu0 0.0
    %798 = vmatpush1.xpose.msra.mxu0 0.0
    %799 = vmatprep.subr.mxu0 0.0
    %800 = vmatpush1.xpose.msra.mxu0 0.0
    %801 = vmatprep.subr.mxu0 0.0
    %802 = vmatpush1.xpose.msra.mxu0 0.0
    %803 = vmatprep.subr.mxu0 0.0
    %804 = vmatpush1.xpose.msra.mxu0 0.0
    %805 = vmatprep.subr.mxu0 0.0
    %806 = vmatpush1.xpose.msra.mxu0 0.0
    %807 = vmatprep.subr.mxu0 0.0
    %808 = vmatpush1.xpose.msra.mxu0 0.0
    %809 = vmatprep.subr.mxu0 0.0
    %810 = vmatpush1.xpose.msra.mxu0 0.0
    %811 = vmatprep.subr.mxu0 0.0
    %812 = vmatpush1.xpose.msra.mxu0 0.0
    %813 = vmatprep.subr.mxu0 0.0
    %814 = vmatpush1.xpose.msra.mxu0 0.0
    %815 = vmatprep.subr.mxu0 0.0
    %816 = vmatpush1.xpose.msra.mxu0 0.0
    %817 = vmatprep.subr.mxu0 0.0
    %818 = vmatpush1.xpose.msra.mxu0 0.0
    %819 = vmatprep.subr.mxu0 0.0
    %820 = vmatpush1.xpose.msra.mxu0 0.0
    %821 = vmatprep.subr.mxu0 0.0
    %822 = vmatpush1.xpose.msra.mxu0 0.0
    %823 = vmatprep.subr.mxu0 0.0
    %824 = vmatpush1.xpose.msra.mxu0 0.0
    %825 = vmatprep.subr.mxu0 0.0
    %826 = vmatpush1.xpose.msra.mxu0 0.0
    %827 = vmatprep.subr.mxu0 0.0
    %828 = vmatpush1.xpose.msra.mxu0 0.0
    %829 = vmatprep.subr.mxu0 0.0
    %830 = vmatpush1.xpose.msra.mxu0 0.0
    %831 = vmatprep.subr.mxu0 0.0
    %832 = vmatpush1.xpose.msra.mxu0 0.0
    %833 = vmatprep.subr.mxu0 0.0
    %834 = vmatpush1.xpose.msra.mxu0 0.0
    %835 = vmatprep.subr.mxu0 0.0
    %836 = vmatpush1.xpose.msra.mxu0 0.0
    %837 = vmatprep.subr.mxu0 0.0
    %838 = vmatpush1.xpose.msra.mxu0 0.0
    %839 = vmatprep.subr.mxu0 0.0
    %840 = vmatpush1.xpose.msra.mxu0 0.0
    %841 = vmatprep.subr.mxu0 0.0
    %842 = vmatpush1.xpose.msra.mxu0 0.0
    %843 = vmatprep.subr.mxu0 0.0
    %844 = vmatpush1.xpose.msra.mxu0 0.0
    %845 = vmatprep.mubr.f32.mxu0 0.0
    %846 = vmatmul.mubr.f32.gmra.mrb[0].mxu0 %v773
    %v847 = vpop.f32.mrb[0].mxu0
    %v848 = vadd.f32 %v64, %v847
    %v849 = vpop.f32.mrb[0].mxu0
    %850 = vmatprep.mubr.f32.mxu0 0.0
    %851 = vmatmul.mubr.f32.gmra.mrb[0].mxu0 %v775
    %v852 = vpop.f32.mrb[0].mxu0
    %v853 = vadd.f32 %v65, %v852
    %v854 = vpop.f32.mrb[0].mxu0
    %855 = vdwg.mxu0
    %v856 = vsel %vm247, %v848, -inf
    %857 = vmax.xlane.f32.xlu0 %v856
    %v858 = vpop.xlane.xlu0 %857
    %v859 = vsel %vm247, %v853, -inf
    %860 = vmax.xlane.f32.xlu0 %v859
    %v861 = vpop.xlane.xlu0 %860
    %v862 = vsub.f32 %v848, %v858
    %v863 = vsub.f32 %v853, %v861
    %v864 = vmul.f32 %v862, 1.442695
    %v865 = vpow.pop %v864
    %v866 = vmul.f32 %v863, 1.442695
    %v867 = vpow.pop %v866
    %v868 = vsel %vm247, %v865, 0.0
    %869 = vadd.xlane.f32.xlu0 %v868
    %v870 = vpop.xlane.xlu0 %869
    %v871 = vsel %vm247, %v867, 0.0
    %872 = vadd.xlane.f32.xlu0 %v871
    %v873 = vpop.xlane.xlu0 %872
    %v874 = vrcp.pop %v870
    %v875 = vrcp.pop %v873
    %v876 = vmul.f32 %v865, %v874
    %v877 = vmul.f32 %v867, %v875
    %s878 = scalar_lea.vmem [#allocation9], 48
    %879 = vst.msk [vmem:[%s878] sm:$0xff] %vm247, %v876
    %880 = vst.msk [vmem:[%s878 + $0x8] sm:$0xff] %vm247, %v877
    %881 = vrot.lane.b32.xlu0 %v149, 40
    %v882 = vpop.permute.xlu0 %881
    %883 = vrot.lane.b32.xlu0 %v154, 40
    %v884 = vpop.permute.xlu0 %883
    %v888 = vsel %vm247, %v876, 0
    %v891 = vsel %vm247, %v877, 0
    %893 = vmatprep.subr.mxu0 0.0
    %894 = vmatpush1.msra.mxu0 %v882
    %895 = vmatprep.subr.mxu0 0.0
    %896 = vmatpush1.msra.mxu0 %v884
    %897 = vmatprep.subr.mxu0 0.0
    %898 = vmatpush1.msra.mxu0 0.0
    %899 = vmatprep.subr.mxu0 0.0
    %900 = vmatpush1.msra.mxu0 0.0
    %901 = vmatprep.subr.mxu0 0.0
    %902 = vmatpush1.msra.mxu0 0.0
    %903 = vmatprep.subr.mxu0 0.0
    %904 = vmatpush1.msra.mxu0 0.0
    %905 = vmatprep.subr.mxu0 0.0
    %906 = vmatpush1.msra.mxu0 0.0
    %907 = vmatprep.subr.mxu0 0.0
    %908 = vmatpush1.msra.mxu0 0.0
    %909 = vmatprep.subr.mxu0 0.0
    %910 = vmatpush1.msra.mxu0 0.0
    %911 = vmatprep.subr.mxu0 0.0
    %912 = vmatpush1.msra.mxu0 0.0
    %913 = vmatprep.subr.mxu0 0.0
    %914 = vmatpush1.msra.mxu0 0.0
    %915 = vmatprep.subr.mxu0 0.0
    %916 = vmatpush1.msra.mxu0 0.0
    %917 = vmatprep.subr.mxu0 0.0
    %918 = vmatpush1.msra.mxu0 0.0
    %919 = vmatprep.subr.mxu0 0.0
    %920 = vmatpush1.msra.mxu0 0.0
    %921 = vmatprep.subr.mxu0 0.0
    %922 = vmatpush1.msra.mxu0 0.0
    %923 = vmatprep.subr.mxu0 0.0
    %924 = vmatpush1.msra.mxu0 0.0
    %925 = vmatprep.subr.mxu0 0.0
    %926 = vmatpush1.msra.mxu0 0.0
    %927 = vmatprep.subr.mxu0 0.0
    %928 = vmatpush1.msra.mxu0 0.0
    %929 = vmatprep.subr.mxu0 0.0
    %930 = vmatpush1.msra.mxu0 0.0
    %931 = vmatprep.subr.mxu0 0.0
    %932 = vmatpush1.msra.mxu0 0.0
    %933 = vmatprep.subr.mxu0 0.0
    %934 = vmatpush1.msra.mxu0 0.0
    %935 = vmatprep.subr.mxu0 0.0
    %936 = vmatpush1.msra.mxu0 0.0
    %937 = vmatprep.subr.mxu0 0.0
    %938 = vmatpush1.msra.mxu0 0.0
    %939 = vmatprep.subr.mxu0 0.0
    %940 = vmatpush1.msra.mxu0 0.0
    %941 = vmatprep.subr.mxu0 0.0
    %942 = vmatpush1.msra.mxu0 0.0
    %943 = vmatprep.subr.mxu0 0.0
    %944 = vmatpush1.msra.mxu0 0.0
    %945 = vmatprep.subr.mxu0 0.0
    %946 = vmatpush1.msra.mxu0 0.0
    %947 = vmatprep.subr.mxu0 0.0
    %948 = vmatpush1.msra.mxu0 0.0
    %949 = vmatprep.subr.mxu0 0.0
    %950 = vmatpush1.msra.mxu0 0.0
    %951 = vmatprep.subr.mxu0 0.0
    %952 = vmatpush1.msra.mxu0 0.0
    %953 = vmatprep.subr.mxu0 0.0
    %954 = vmatpush1.msra.mxu0 0.0
    %955 = vmatprep.subr.mxu0 0.0
    %956 = vmatpush1.msra.mxu0 0.0
    %957 = vmatprep.mubr.f32.mxu0 0.0
    %958 = vmatmul.mubr.f32.gmra.mrb[0].mxu0 %v888
    %v959 = vpop.f32.mrb[0].mxu0
    %v960 = vadd.f32 0.0, %v959
    %v961 = vpop.f32.mrb[0].mxu0
    %962 = vmatprep.mubr.f32.mxu0 0.0
    %963 = vmatmul.mubr.f32.gmra.mrb[0].mxu0 %v891
    %v964 = vpop.f32.mrb[0].mxu0
    %v965 = vadd.f32 0.0, %v964
    %v966 = vpop.f32.mrb[0].mxu0
    %967 = vdwg.mxu0
    %970 = vrot.lane.b32.xlu0 %v554, 8
    %v971 = vpop.permute.xlu0 %970
    %972 = vrot.lane.b32.xlu0 %v559, 8
    %v973 = vpop.permute.xlu0 %972
    %978 = vrot.lane.b32.xlu0 %v757, 16
    %v979 = vpop.permute.xlu0 %978
    %980 = vrot.lane.b32.xlu0 %v762, 16
    %v981 = vpop.permute.xlu0 %980
    %986 = vrot.lane.b32.xlu0 %v960, 24
    %v987 = vpop.permute.xlu0 %986
    %988 = vrot.lane.b32.xlu0 %v965, 24
    %v989 = vpop.permute.xlu0 %988
    %v992 = vsel %vm163, %v351, %v971
    %v993 = vsel %vm163, %v356, %v973
    %v994 = vsel %vm247, %v992, %v979
    %v995 = vsel %vm247, %v993, %v981
    %vm996 = vcmask 195584
    %v997 = vsel %vm996, %v994, %v987
    %v998 = vsel %vm996, %v995, %v989
    %v999 = vld [vmem:[#allocation7] sm:$0xff]
    %v1000 = vld [vmem:[#allocation7 + $0x8] sm:$0xff]
    %v1001 = vld [vmem:[#allocation7 + $0x10] sm:$0xff]
    %v1002 = vld [vmem:[#allocation7 + $0x18] sm:$0xff]
    %v1003 = vld [vmem:[%s3 + $0x1] sm:$0x1]
    %v1004 = vlaneseq
    %v1005 = vshrl.u32 %v1004, 7
    %v1006 = vsub.s32 0, %v1005
    %v1007 = vrot.slane %v1003, %v1006
    %1012 = vrot.lane.b32.xlu0 %v999, 32
    %v1013 = vpop.permute.xlu0 %1012
    %1014 = vrot.lane.b32.xlu0 %v1000, 32
    %v1015 = vpop.permute.xlu0 %1014
    %1016 = vrot.lane.b32.xlu0 %v1001, 32
    %v1017 = vpop.permute.xlu0 %1016
    %1018 = vrot.lane.b32.xlu0 %v1002, 32
    %v1019 = vpop.permute.xlu0 %1018
    %v1025 = vsel %vm75, %v997, 0
    %v1028 = vsel %vm75, %v998, 0
    %1030 = vmatprep.subr.mxu0 0.0
    %1031 = vmatpush1.msra.mxu0 %v1013
    %1032 = vmatprep.subr.mxu0 0.0
    %1033 = vmatpush1.msra.mxu0 %v1015
    %1034 = vmatprep.subr.mxu0 0.0
    %1035 = vmatpush1.msra.mxu0 %v1017
    %1036 = vmatprep.subr.mxu0 0.0
    %1037 = vmatpush1.msra.mxu0 %v1019
    %1038 = vmatprep.subr.mxu0 0.0
    %1039 = vmatpush1.msra.mxu0 0.0
    %1040 = vmatprep.subr.mxu0 0.0
    %1041 = vmatpush1.msra.mxu0 0.0
    %1042 = vmatprep.subr.mxu0 0.0
    %1043 = vmatpush1.msra.mxu0 0.0
    %1044 = vmatprep.subr.mxu0 0.0
    %1045 = vmatpush1.msra.mxu0 0.0
    %1046 = vmatprep.subr.mxu0 0.0
    %1047 = vmatpush1.msra.mxu0 0.0
    %1048 = vmatprep.subr.mxu0 0.0
    %1049 = vmatpush1.msra.mxu0 0.0
    %1050 = vmatprep.subr.mxu0 0.0
    %1051 = vmatpush1.msra.mxu0 0.0
    %1052 = vmatprep.subr.mxu0 0.0
    %1053 = vmatpush1.msra.mxu0 0.0
    %1054 = vmatprep.subr.mxu0 0.0
    %1055 = vmatpush1.msra.mxu0 0.0
    %1056 = vmatprep.subr.mxu0 0.0
    %1057 = vmatpush1.msra.mxu0 0.0
    %1058 = vmatprep.subr.mxu0 0.0
    %1059 = vmatpush1.msra.mxu0 0.0
    %1060 = vmatprep.subr.mxu0 0.0
    %1061 = vmatpush1.msra.mxu0 0.0
    %1062 = vmatprep.subr.mxu0 0.0
    %1063 = vmatpush1.msra.mxu0 0.0
    %1064 = vmatprep.subr.mxu0 0.0
    %1065 = vmatpush1.msra.mxu0 0.0
    %1066 = vmatprep.subr.mxu0 0.0
    %1067 = vmatpush1.msra.mxu0 0.0
    %1068 = vmatprep.subr.mxu0 0.0
    %1069 = vmatpush1.msra.mxu0 0.0
    %1070 = vmatprep.subr.mxu0 0.0
    %1071 = vmatpush1.msra.mxu0 0.0
    %1072 = vmatprep.subr.mxu0 0.0
    %1073 = vmatpush1.msra.mxu0 0.0
    %1074 = vmatprep.subr.mxu0 0.0
    %1075 = vmatpush1.msra.mxu0 0.0
    %1076 = vmatprep.subr.mxu0 0.0
    %1077 = vmatpush1.msra.mxu0 0.0
    %1078 = vmatprep.subr.mxu0 0.0
    %1079 = vmatpush1.msra.mxu0 0.0
    %1080 = vmatprep.subr.mxu0 0.0
    %1081 = vmatpush1.msra.mxu0 0.0
    %1082 = vmatprep.subr.mxu0 0.0
    %1083 = vmatpush1.msra.mxu0 0.0
    %1084 = vmatprep.subr.mxu0 0.0
    %1085 = vmatpush1.msra.mxu0 0.0
    %1086 = vmatprep.subr.mxu0 0.0
    %1087 = vmatpush1.msra.mxu0 0.0
    %1088 = vmatprep.subr.mxu0 0.0
    %1089 = vmatpush1.msra.mxu0 0.0
    %1090 = vmatprep.subr.mxu0 0.0
    %1091 = vmatpush1.msra.mxu0 0.0
    %1092 = vmatprep.subr.mxu0 0.0
    %1093 = vmatpush1.msra.mxu0 0.0
    %1094 = vmatprep.mubr.f32.mxu0 0.0
    %1095 = vmatmul.mubr.f32.gmra.mrb[0].mxu0 %v1025
    %v1096 = vpop.f32.mrb[0].mxu0
    %v1097 = vadd.f32 %v1007, %v1096
    %v1098 = vpop.f32.mrb[0].mxu0
    %1099 = vmatprep.mubr.f32.mxu0 0.0
    %1100 = vmatmul.mubr.f32.gmra.mrb[0].mxu0 %v1028
    %v1101 = vpop.f32.mrb[0].mxu0
    %v1102 = vadd.f32 %v1007, %v1101
    %v1103 = vpop.f32.mrb[0].mxu0
    %1104 = vdwg.mxu0
    %v1105 = vmax.f32 %v1097, 0.0
    %v1106 = vmax.f32 %v1102, 0.0
    %v1107 = vadd.f32 %v1105, %v62
    %v1108 = vadd.f32 %v1106, %v63
    %v1109 = vsel %vm75, %v1107, 0.0
    %1110 = vadd.xlane.f32.xlu0 %v1109
    %v1111 = vpop.xlane.xlu0 %1110
    %v1112 = vsel %vm75, %v1108, 0.0
    %1113 = vadd.xlane.f32.xlu0 %v1112
    %v1114 = vpop.xlane.xlu0 %1113
    %v1115 = vrcp.pop 32.0
    %v1116 = vmul.f32 %v1111, %v1115
    %v1117 = vmul.f32 %v1114, %v1115
    %v1118 = vmul.f32 %v1107, %v1107
    %v1119 = vmul.f32 %v1108, %v1108
    %v1120 = vsel %vm75, %v1118, 0.0
    %1121 = vadd.xlane.f32.xlu0 %v1120
    %v1122 = vpop.xlane.xlu0 %1121
    %v1123 = vsel %vm75, %v1119, 0.0
    %1124 = vadd.xlane.f32.xlu0 %v1123
    %v1125 = vpop.xlane.xlu0 %1124
    %v1126 = vmul.f32 %v1122, %v1115
    %v1127 = vmul.f32 %v1125, %v1115
    %v1128 = vmul.f32 %v1116, %v1116
    %v1129 = vmul.f32 %v1117, %v1117
    %v1130 = vsub.f32 %v1126, %v1128
    %v1131 = vsub.f32 %v1127, %v1129
    %v1132 = vsub.f32 %v1107, %v1116
    %v1133 = vsub.f32 %v1108, %v1117
    %v1134 = vadd.f32 %v1130, 1e-05
    %v1135 = vadd.f32 %v1131, 1e-05
    %v1136 = vrsqrt.pop %v1134
    %v1137 = vrsqrt.pop %v1135
    %v1138 = vmul.f32 %v1132, %v1136
    %v1139 = vmul.f32 %v1133, %v1137
    %1141 = vrot.lane.b32.xlu0 %v1007, 96
    %v1142 = vpop.permute.xlu0 %1141
    %v1144 = vmul.f32 %v1138, %v1142
    %v1145 = vmul.f32 %v1139, %v1142
    %1146 = vrot.lane.b32.xlu0 %v1007, 64
    %v1147 = vpop.permute.xlu0 %1146
    %v1149 = vadd.f32 %v1144, %v1147
    %v1150 = vadd.f32 %v1145, %v1147
    %1151 = vst.msk [vmem:[#allocation8] sm:$0xff] %vm75, %v1149
    %1152 = vst.msk [vmem:[#allocation8 + $0x8] sm:$0xff] %vm75, %v1150
    // Predicated region
    $region30: #{tpu_custom_call.1} parent=1 // pred_check
      _
    $region31: #{tpu_custom_call.1} parent=1 // pred_check_branch
      %1154 = sbr.rel (0) target = $region33
    $region32: #{tpu_custom_call.1} parent=1 // pred_region
      %s1156 = ssub.s32 256, 256
      %1157 = vsyncadd [#allocation4], %s1156
      %s1158 = sshll.u32 [#allocation8], 4
      %s1159 = int_to_ptr.vmem [resolvable:$true] %s1158
      %1164 = dma.vmem_to_hbm [thread:$0]  %s1159, 256, %s4, [#allocation4], 128, 128, 8
    $region33: #{tpu_custom_call.1} parent=1 // pred_fallthru
      _
    // Predicated region
    $region34: #{tpu_custom_call.1} parent=1 // pred_check
      _
    $region35: #{tpu_custom_call.1} parent=1 // pred_check_branch
      %1166 = sbr.rel (0) target = $region37
    $region36: #{tpu_custom_call.1} parent=1 // pred_region
      %s1168 = ssub.s32 1024, 1024
      %1169 = vsyncadd [#allocation10], %s1168
      %s1170 = sshll.u32 [#allocation9], 4
      %s1171 = int_to_ptr.vmem [resolvable:$true] %s1170
      %1176 = dma.vmem_to_hbm [thread:$0]  %s1171, 1024, %s5, [#allocation10], 128, 128, 8
    $region37: #{tpu_custom_call.1} parent=1 // pred_fallthru
      _
    // Predicated region
    $region38: #{tpu_custom_call.1} parent=1 // pred_check
      _
    $region39: #{tpu_custom_call.1} parent=1 // pred_check_branch
      %1178 = sbr.rel (0) target = $region41
    $region40: #{tpu_custom_call.1} parent=1 // pred_region
      %1179 = dma.done [#allocation4], 256
    $region41: #{tpu_custom_call.1} parent=1 // pred_fallthru
      _
    // Predicated region
    $region42: #{tpu_custom_call.1} parent=1 // pred_check
      _
    $region43: #{tpu_custom_call.1} parent=1 // pred_check_branch
      %1181 = sbr.rel (0) target = $region45
    $region44: #{tpu_custom_call.1} parent=1 // pred_region
      %1182 = dma.done [#allocation10], 1024
    $region45: #{tpu_custom_call.1} parent=1 // pred_fallthru
      _
    %1183 = vsyncpa [#allocation3], 1
    %1184 = vsyncpa [#allocation6], 1
    %1185 = vsyncpa [#allocation4], 1
    %1186 = vsyncpa [#allocation10], 1

</llo_original>
